<compile_context>
chip_gen: v5e
topology: v5e:2x2
jax: 0.10.0
libtpu: 0.0.40
codegen_flags: <defaults>
</compile_context>

<pallas_src>
import jax
import jax.numpy as jnp
from jax.experimental import pallas as pl
from jax.experimental.pallas import tpu as pltpu


def _round_up(n, m):
    return ((n + m - 1) // m) * m


def _fuzzy_kernel(xT_ref, c_ref, inv_ref, o_ref):
    # xT_ref: [V, TB]   (batch tile on the lane axis)
    # c_ref:  [V, M]    Gaussian centers
    # inv_ref:[V, M]    precomputed 0.5 / sigma^2 (hoisted out of the kernel)
    # o_ref:  [V, M, TB]
    x = xT_ref[...]                              # [V, TB]
    c = c_ref[...]                               # [V, M]
    inv = inv_ref[...]                           # [V, M]
    diff = x[:, None, :] - c[:, :, None]         # [V, M, TB]: sublane/lane splats
    o_ref[...] = jnp.exp(-(diff * diff) * inv[:, :, None]).astype(o_ref.dtype)


def fuzzy_layer_forward(x, centers, sigmas, *, block_b=512,
                        out_dtype=jnp.float32):
    """Pallas forward: x [B, V] -> memberships [B, V, M]."""
    B, V = x.shape
    Vc, M = centers.shape
    assert V == Vc, "{} is wrong number of input params".format(Vc)
    assert block_b % 128 == 0, "batch tile must be a multiple of 128 lanes"

    # Hoist the reciprocal: constant across the batch grid, computed once.
    inv_two_var = (0.5 / (sigmas * sigmas)).astype(jnp.float32)   # [V, M]

    # Lane-dense layout: batch on the lane (last) axis.
    xT = x.astype(jnp.float32).T                                  # [V, B]

    # Pad B to a multiple of the batch tile to satisfy lane tiling.
    tb = min(block_b, _round_up(B, 128))
    Bp = _round_up(B, tb)
    if Bp != B:
        xT = jnp.pad(xT, ((0, 0), (0, Bp - B)))

    out_vmb = pl.pallas_call(
        _fuzzy_kernel,
        out_shape=jax.ShapeDtypeStruct((V, M, Bp), out_dtype),
        grid=(Bp // tb,),
        in_specs=[
            pl.BlockSpec((V, tb), lambda i: (0, i)),     # xT batch tile
            pl.BlockSpec((V, M), lambda i: (0, 0)),      # centers (tiny, const)
            pl.BlockSpec((V, M), lambda i: (0, 0)),      # 0.5/sigma^2 (tiny, const)
        ],
        out_specs=pl.BlockSpec((V, M, tb), lambda i: (0, 0, i)),
        compiler_params=pltpu.CompilerParams(
            dimension_semantics=("parallel",),
        ),
    )(xT, centers.astype(jnp.float32), inv_two_var)

    # [V, M, Bp] -> [B, V, M] to match torch.stack(..., dim=1).
    return jnp.transpose(out_vmb[:, :, :B], (2, 0, 1))


def fuzzy_layer_reference(x, centers, sigmas):
    diff = x[:, :, None] - centers[None, :, :]
    return jnp.exp(-(diff ** 2) / (2.0 * sigmas[None, :, :] ** 2))


if __name__ == "__main__":
    # Small shapes consistent with the module: batch=8 samples,
    # vars_num=4 fuzzy input variables, max_mfsnum=8 membership fns each.
    B, V, M = 8, 4, 8

    key = jax.random.PRNGKey(0)
    kx, kx2 = jax.random.split(key, 2)
    x = jax.random.normal(kx, (B, V), dtype=jnp.float32)

    # Deterministic parameter init (no checkpoint load):
    base_c = jnp.linspace(-2.0, 2.0, M, dtype=jnp.float32)          # [M]
    var_off = jnp.linspace(-0.25, 0.25, V, dtype=jnp.float32)       # [V]
    centers = base_c[None, :] + var_off[:, None]                    # [V, M]
    sigmas = 0.5 + 0.05 * jnp.arange(V * M, dtype=jnp.float32).reshape(V, M)

    # 1) Primary check at the module's small shape (f32, exact parity).
    out = jax.block_until_ready(fuzzy_layer_forward(x, centers, sigmas))
    ref = fuzzy_layer_reference(x, centers, sigmas)
    assert out.shape == (B, V, M)
    assert jnp.allclose(out, ref, atol=1e-5, rtol=1e-5)

    # 2) Larger, non-multiple-of-tile batch to exercise the pipelined grid
    #    and the padding/slicing path (still tiny: ~100 KiB output).
    B2 = 777
    x2 = jax.random.normal(kx2, (B2, V), dtype=jnp.float32)
    out2 = jax.block_until_ready(fuzzy_layer_forward(x2, centers, sigmas))
    ref2 = fuzzy_layer_reference(x2, centers, sigmas)
    assert out2.shape == (B2, V, M)
    assert jnp.allclose(out2, ref2, atol=1e-5, rtol=1e-5)

    # 3) Optional bf16 output path (halved HBM writeback on v6e/v7x);
    #    tolerances loosened accordingly.
    out_bf16 = jax.block_until_ready(
        fuzzy_layer_forward(x2, centers, sigmas, out_dtype=jnp.bfloat16))
    assert jnp.allclose(out_bf16.astype(jnp.float32), ref2,
                        atol=1e-2, rtol=1e-2)

    print("KERNEL_OK")
</pallas_src>

<mosaic_0001>
module attributes {stable_mosaic.version = 11 : i64} {
  func.func @_fuzzy_kernel(%arg0: i32, %arg1: memref<4x128xf32, #tpu.memory_space<vmem>>, %arg2: memref<4x8xf32, #tpu.memory_space<vmem>>, %arg3: memref<4x8xf32, #tpu.memory_space<vmem>>, %arg4: memref<4x8x128xf32, #tpu.memory_space<vmem>>) attributes {dimension_semantics = [#tpu.dimension_semantics<parallel>], iteration_bounds = array<i64: 1>, scalar_prefetch = 0 : i64, scratch_operands = 0 : i64, tpu.core_type = #tpu.core_type<tc>, window_params = [{transform_indices = @transform_0, window_bounds = array<i64: 4, 128>}, {pipeline_mode = #tpu.pipeline_mode<synchronous>, transform_indices = @transform_1, window_bounds = array<i64: 4, 8>}, {pipeline_mode = #tpu.pipeline_mode<synchronous>, transform_indices = @transform_2, window_bounds = array<i64: 4, 8>}, {transform_indices = @transform_3, window_bounds = array<i64: 4, 8, 128>}]} {
    %c0 = arith.constant 0 : index
    %c0_0 = arith.constant 0 : index
    %0 = vector.load %arg1[%c0, %c0_0] : memref<4x128xf32, #tpu.memory_space<vmem>>, vector<4x128xf32>
    %c0_1 = arith.constant 0 : index
    %c0_2 = arith.constant 0 : index
    %1 = vector.load %arg2[%c0_1, %c0_2] : memref<4x8xf32, #tpu.memory_space<vmem>>, vector<4x8xf32>
    %c0_3 = arith.constant 0 : index
    %c0_4 = arith.constant 0 : index
    %2 = vector.load %arg3[%c0_3, %c0_4] : memref<4x8xf32, #tpu.memory_space<vmem>>, vector<4x8xf32>
    %3 = vector.shape_cast %0 : vector<4x128xf32> to vector<4x1x128xf32>
    %4 = vector.shape_cast %1 : vector<4x8xf32> to vector<4x8x1xf32>
    %5 = vector.broadcast %3 : vector<4x1x128xf32> to vector<4x8x128xf32>
    %6 = vector.broadcast %4 : vector<4x8x1xf32> to vector<4x8x128xf32>
    %7 = arith.subf %5, %6 : vector<4x8x128xf32>
    %8 = arith.mulf %7, %7 : vector<4x8x128xf32>
    %cst = arith.constant 0.000000e+00 : f32
    %9 = vector.broadcast %cst : f32 to vector<4x8x128xf32>
    %10 = arith.subf %9, %8 : vector<4x8x128xf32>
    %11 = vector.shape_cast %2 : vector<4x8xf32> to vector<4x8x1xf32>
    %12 = vector.broadcast %11 : vector<4x8x1xf32> to vector<4x8x128xf32>
    %13 = arith.mulf %10, %12 : vector<4x8x128xf32>
    %14 = math.exp %13 : vector<4x8x128xf32>
    %c0_5 = arith.constant 0 : index
    %c0_6 = arith.constant 0 : index
    %c0_7 = arith.constant 0 : index
    %15 = vector.load %arg4[%c0_5, %c0_6, %c0_7] : memref<4x8x128xf32, #tpu.memory_space<vmem>>, vector<4x8x128xf32>
    tpu.vector_store %arg4[%c0_5, %c0_6, %c0_7], %14 {strides = array<i32>} : memref<4x8x128xf32, #tpu.memory_space<vmem>>, vector<4x8x128xf32>,
    return
  }
  func.func @transform_0(%arg0: i32) -> (i32, i32) {
    %c0_i32 = arith.constant 0 : i32
    %c0_i32_0 = arith.constant 0 : i32
    return %c0_i32, %arg0 : i32, i32
  }
  func.func @transform_1(%arg0: i32) -> (i32, i32) {
    %c0_i32 = arith.constant 0 : i32
    %c0_i32_0 = arith.constant 0 : i32
    %c0_i32_1 = arith.constant 0 : i32
    return %c0_i32, %c0_i32_0 : i32, i32
  }
  func.func @transform_2(%arg0: i32) -> (i32, i32) {
    %c0_i32 = arith.constant 0 : i32
    %c0_i32_0 = arith.constant 0 : i32
    %c0_i32_1 = arith.constant 0 : i32
    return %c0_i32, %c0_i32_0 : i32, i32
  }
  func.func @transform_3(%arg0: i32) -> (i32, i32, i32) {
    %c0_i32 = arith.constant 0 : i32
    %c0_i32_0 = arith.constant 0 : i32
    %c0_i32_1 = arith.constant 0 : i32
    return %c0_i32, %c0_i32_0, %arg0 : i32, i32, i32
  }
}

</mosaic_0001>

<llo_original>
// kernel: tpu_custom_call.1
$region0: #{tpu_custom_call.1}
  #allocation0 [shape = 'u32[]', space=smem, size = 0x4, offset = 0x4, fixed_abs, tag = 'smem constant byte address 0x4 - core index']
  #allocation1 [shape = 'u32[72,128]{1,0:T(1,128)}', space=vmem, size = 0x9000, scoped, tag = 'internal scratch']
  %s0 = inlined_call_operand.hbm [shape: f32[4,128], index: 0, kind: input, shape index: {}]
  %s1 = inlined_call_operand.hbm [shape: f32[4,8], index: 1, kind: input, shape index: {}]
  %s2 = inlined_call_operand.hbm [shape: f32[4,8], index: 2, kind: input, shape index: {}]
  %s3 = inlined_call_operand.hbm [shape: f32[4,8,128], index: 3, kind: output, shape index: {}]
  %s4 = sld [smem:[#allocation0]]
  $region34: #{tpu_custom_call.1} parent=0
    _
  %s6 = ssub.s32 1, %s4
  %s7 = scalar_select 0, %s6, %s4
  $region1: #{tpu_custom_call.1} parent=0
    #allocation2 [shape = 'u8[2048]{0}', space=vmem, size = 0x800, scoped, tag = 'input window, operand 0, single buffered']
    #allocation3 [shape = 's32[1]{0}', space=sflag, size = 0x4, scoped, tag = 'scoped memory for tpu_custom_call.1']
    #allocation4 [shape = 's32[1]{0}', space=sflag, size = 0x4, scoped, tag = 'scoped memory for tpu_custom_call.1']
    #allocation5 [shape = 'u8[2048]{0}', space=vmem, size = 0x800, scoped, tag = 'input window, operand 1, single buffered']
    #allocation6 [shape = 's32[1]{0}', space=sflag, size = 0x4, scoped, tag = 'scoped memory for tpu_custom_call.1']
    #allocation7 [shape = 'u8[2048]{0}', space=vmem, size = 0x800, scoped, tag = 'input window, operand 2, single buffered']
    #allocation8 [shape = 'u8[16384]{0}', space=vmem, size = 0x4000, scoped, tag = 'output window, operand 0, single buffered']
    %8 = vsyncpa [#allocation3], 0
    %9 = vsyncpa [#allocation6], 0
    %10 = vsyncpa [#allocation4], 0
    // Predicated region
    $region2: #{tpu_custom_call.1} parent=1 // pred_check
      _
    $region3: #{tpu_custom_call.1} parent=1 // pred_check_branch
      %12 = sbr.rel (0) target = $region5
    $region4: #{tpu_custom_call.1} parent=1 // pred_region
      %14 = vsyncadd [#allocation3], 0
      %s16 = sshll.u32 %s0, 4
      %s17 = int_to_ptr.hbm [resolvable:$true] %s16
      %s18 = sshll.u32 [#allocation2], 4
      %s19 = int_to_ptr.vmem [resolvable:$true] %s18
      %21 = dma.hbm_to_vmem [thread:$0]  %s17, 64, %s19, [#allocation3]
    $region5: #{tpu_custom_call.1} parent=1 // pred_fallthru
      _
    // Predicated region
    $region6: #{tpu_custom_call.1} parent=1 // pred_check
      _
    $region7: #{tpu_custom_call.1} parent=1 // pred_check_branch
      %23 = sbr.rel (0) target = $region9
    $region8: #{tpu_custom_call.1} parent=1 // pred_region
      %25 = vsyncadd [#allocation6], 0
      %s27 = sshll.u32 %s1, 4
      %s28 = int_to_ptr.hbm [resolvable:$true] %s27
      %s29 = sshll.u32 [#allocation5], 4
      %s30 = int_to_ptr.vmem [resolvable:$true] %s29
      %32 = dma.hbm_to_vmem [thread:$0]  %s28, 64, %s30, [#allocation6]
    $region9: #{tpu_custom_call.1} parent=1 // pred_fallthru
      _
    // Predicated region
    $region10: #{tpu_custom_call.1} parent=1 // pred_check
      _
    $region11: #{tpu_custom_call.1} parent=1 // pred_check_branch
      %34 = sbr.rel (0) target = $region13
    $region12: #{tpu_custom_call.1} parent=1 // pred_region
      %36 = vsyncadd [#allocation6], 0
      %s38 = sshll.u32 %s2, 4
      %s39 = int_to_ptr.hbm [resolvable:$true] %s38
      %s40 = sshll.u32 [#allocation7], 4
      %s41 = int_to_ptr.vmem [resolvable:$true] %s40
      %43 = dma.hbm_to_vmem [thread:$0]  %s39, 64, %s41, [#allocation6]
    $region13: #{tpu_custom_call.1} parent=1 // pred_fallthru
      _
    // Predicated region
    $region14: #{tpu_custom_call.1} parent=1 // pred_check
      _
    $region15: #{tpu_custom_call.1} parent=1 // pred_check_branch
      %45 = sbr.rel (0) target = $region17
    $region16: #{tpu_custom_call.1} parent=1 // pred_region
      %47 = dma.done [#allocation3], 64
    $region17: #{tpu_custom_call.1} parent=1 // pred_fallthru
      _
    // Predicated region
    $region18: #{tpu_custom_call.1} parent=1 // pred_check
      _
    $region19: #{tpu_custom_call.1} parent=1 // pred_check_branch
      %49 = sbr.rel (0) target = $region21
    $region20: #{tpu_custom_call.1} parent=1 // pred_region
      %51 = dma.done [#allocation6], 64
    $region21: #{tpu_custom_call.1} parent=1 // pred_fallthru
      _
    // Predicated region
    $region22: #{tpu_custom_call.1} parent=1 // pred_check
      _
    $region23: #{tpu_custom_call.1} parent=1 // pred_check_branch
      %53 = sbr.rel (0) target = $region25
    $region24: #{tpu_custom_call.1} parent=1 // pred_region
      %55 = dma.done [#allocation6], 64
    $region25: #{tpu_custom_call.1} parent=1 // pred_fallthru
      _
    %v56 = vld [vmem:[#allocation2] sm:$0xf]
    %v57 = vld [vmem:[#allocation5] sm:$0xf]
    %v58 = vld [vmem:[#allocation7] sm:$0xf]
    %v60 = vrot.slane %v56, 1
    %v61 = vrot.slane %v56, 2
    %v62 = vrot.slane %v56, 3
    %v63 = vperm.slane %v57, 0
    %v64 = vlaneseq
    %v65 = vshrl.u32 %v64, 7
    %67 = vset.pattern.permute.xlu0 %v65
    %68 = vperm.xlu0 %67, %v63
    %v69 = vpop.permute.xlu0 %68
    %v70 = vperm.slane %v57, 1
    %v71 = vlaneseq
    %v72 = vshrl.u32 %v71, 7
    %74 = vset.pattern.permute.xlu0 %v72
    %75 = vperm.xlu0 %74, %v70
    %v76 = vpop.permute.xlu0 %75
    %v77 = vperm.slane %v57, 2
    %v78 = vlaneseq
    %v79 = vshrl.u32 %v78, 7
    %81 = vset.pattern.permute.xlu0 %v79
    %82 = vperm.xlu0 %81, %v77
    %v83 = vpop.permute.xlu0 %82
    %v84 = vperm.slane %v57, 3
    %v85 = vlaneseq
    %v86 = vshrl.u32 %v85, 7
    %88 = vset.pattern.permute.xlu0 %v86
    %89 = vperm.xlu0 %88, %v84
    %v90 = vpop.permute.xlu0 %89
    %v91 = vperm.slane %v56, 0
    %v92 = vperm.slane %v60, 0
    %v93 = vperm.slane %v61, 0
    %v94 = vperm.slane %v62, 0
    %v99 = vsub.f32 %v91, %v69
    %v100 = vsub.f32 %v92, %v76
    %v101 = vsub.f32 %v93, %v83
    %v102 = vsub.f32 %v94, %v90
    %v103 = vmul.f32 %v99, %v99
    %v104 = vmul.f32 %v100, %v100
    %v105 = vmul.f32 %v101, %v101
    %v106 = vmul.f32 %v102, %v102
    %v107 = vsub.f32 0.0, %v103
    %v108 = vsub.f32 0.0, %v104
    %v109 = vsub.f32 0.0, %v105
    %v110 = vsub.f32 0.0, %v106
    %v111 = vperm.slane %v58, 0
    %v112 = vlaneseq
    %v113 = vshrl.u32 %v112, 7
    %115 = vset.pattern.permute.xlu0 %v113
    %116 = vperm.xlu0 %115, %v111
    %v117 = vpop.permute.xlu0 %116
    %v118 = vperm.slane %v58, 1
    %v119 = vlaneseq
    %v120 = vshrl.u32 %v119, 7
    %122 = vset.pattern.permute.xlu0 %v120
    %123 = vperm.xlu0 %122, %v118
    %v124 = vpop.permute.xlu0 %123
    %v125 = vperm.slane %v58, 2
    %v126 = vlaneseq
    %v127 = vshrl.u32 %v126, 7
    %129 = vset.pattern.permute.xlu0 %v127
    %130 = vperm.xlu0 %129, %v125
    %v131 = vpop.permute.xlu0 %130
    %v132 = vperm.slane %v58, 3
    %v133 = vlaneseq
    %v134 = vshrl.u32 %v133, 7
    %136 = vset.pattern.permute.xlu0 %v134
    %137 = vperm.xlu0 %136, %v132
    %v138 = vpop.permute.xlu0 %137
    %v139 = vmul.f32 %v107, %v117
    %v140 = vmul.f32 %v108, %v124
    %v141 = vmul.f32 %v109, %v131
    %v142 = vmul.f32 %v110, %v138
    %v143 = vmul.f32 %v139, 1.442695
    %v144 = vpow.pop %v143
    %v145 = vmul.f32 %v140, 1.442695
    %v146 = vpow.pop %v145
    %v147 = vmul.f32 %v141, 1.442695
    %v148 = vpow.pop %v147
    %v149 = vmul.f32 %v142, 1.442695
    %v150 = vpow.pop %v149
    %151 = vst [vmem:[#allocation8] sm:$0xff] %v144
    %152 = vst [vmem:[#allocation8 + $0x8] sm:$0xff] %v146
    %153 = vst [vmem:[#allocation8 + $0x10] sm:$0xff] %v148
    %154 = vst [vmem:[#allocation8 + $0x18] sm:$0xff] %v150
    // Predicated region
    $region26: #{tpu_custom_call.1} parent=1 // pred_check
      _
    $region27: #{tpu_custom_call.1} parent=1 // pred_check_branch
      %156 = sbr.rel (0) target = $region29
    $region28: #{tpu_custom_call.1} parent=1 // pred_region
      %158 = vsyncadd [#allocation4], 0
      %s159 = sshll.u32 [#allocation8], 4
      %s160 = int_to_ptr.vmem [resolvable:$true] %s159
      %s161 = sshll.u32 %s3, 4
      %s162 = int_to_ptr.hbm [resolvable:$true] %s161
      %167 = dma.vmem_to_hbm [thread:$0]  %s160, 512, %s162, [#allocation4], 128, 128, 8
    $region29: #{tpu_custom_call.1} parent=1 // pred_fallthru
      _
    // Predicated region
    $region30: #{tpu_custom_call.1} parent=1 // pred_check
      _
    $region31: #{tpu_custom_call.1} parent=1 // pred_check_branch
      %169 = sbr.rel (0) target = $region33
    $region32: #{tpu_custom_call.1} parent=1 // pred_region
      %171 = dma.done [#allocation4], 512
    $region33: #{tpu_custom_call.1} parent=1 // pred_fallthru
      _
    %172 = vsyncpa [#allocation3], 1
    %173 = vsyncpa [#allocation6], 1
    %174 = vsyncpa [#allocation4], 1

</llo_original>
